<compile_context>
chip_gen: v5e
topology: v5e:2x2
jax: 0.10.0
libtpu: 0.0.40
codegen_flags: <defaults>
</compile_context>

<pallas_src>
import functools

import jax
import jax.numpy as jnp
from jax.experimental import pallas as pl
from jax.experimental.pallas import tpu as pltpu


def _round_up(x, m):
    return ((x + m - 1) // m) * m


def _pick_tile(dim, pref, quantum):
    """Largest multiple of `quantum` <= pref that divides `dim`; if no such
    divisor exists, return pref rounded to `quantum` (caller pads `dim` up)."""
    pref = max(quantum, (min(pref, _round_up(dim, quantum)) // quantum) * quantum)
    t = pref
    while t >= quantum:
        if dim % t == 0:
            return t
        t -= quantum
    return pref


# ---------------------------------------------------------------------------
# Kernels
# ---------------------------------------------------------------------------
def _matmul_sigmoid_kernel(x_ref, w_ref, o_ref):
    # Full contraction in one MXU matmul (bf16 in, f32 accumulate) + fused
    # sigmoid epilogue (exp rides the EUP slot).
    z = jnp.dot(x_ref[...], w_ref[...], preferred_element_type=jnp.float32)
    o_ref[...] = jax.nn.sigmoid(z).astype(o_ref.dtype)


def _ktiled_kernel(x_ref, w_ref, o_ref):
    # o_ref is f32 and resident across the k axis: accumulate directly into it,
    # apply the sigmoid in place on the last reduction step.
    k = pl.program_id(2)

    @pl.when(k == 0)
    def _():
        o_ref[...] = jnp.zeros_like(o_ref)

    o_ref[...] += jnp.dot(x_ref[...], w_ref[...],
                          preferred_element_type=jnp.float32)

    @pl.when(k == pl.num_programs(2) - 1)
    def _():
        o_ref[...] = jax.nn.sigmoid(o_ref[...])


# ---------------------------------------------------------------------------
# Wrapper
# ---------------------------------------------------------------------------
_VMEM_LIMIT = 48 * 1024 * 1024  # > default scoped limit on v5e/v6e, < v7x physical


@functools.partial(jax.jit, static_argnames=("tm", "tn", "tk"))
def linear_layer_forward(x, w, *, tm=512, tn=512, tk=1024):
    """sigmoid(x @ w) -- equivalent to the PyTorch linear_layer.forward."""
    M, K = x.shape
    K2, N = w.shape
    assert K == K2, f"inner dims must match, got {K} vs {K2}"

    out_dtype = jnp.float32
    # bf16 operands for the MXU; accumulation stays f32 (preferred_element_type).
    xb = x.astype(jnp.bfloat16)
    wb = w.astype(jnp.bfloat16)
    ib = 2      # bf16 operand bytes
    ob = 4      # f32 output bytes
    flops = 2 * M * N * K

    # ---- Path A: whole problem fits comfortably in VMEM -> single call,
    #      no grid, no pipeline / per-step overhead. --------------------------
    if ib * (M * K + K * N) + ob * M * N <= (4 << 20):
        cost = pl.CostEstimate(
            flops=flops, transcendentals=M * N,
            bytes_accessed=ib * (M * K + K * N) + ob * M * N)
        return pl.pallas_call(
            _matmul_sigmoid_kernel,
            out_shape=jax.ShapeDtypeStruct((M, N), out_dtype),
            in_specs=[
                pl.BlockSpec((M, K), lambda: (0, 0)),
                pl.BlockSpec((K, N), lambda: (0, 0)),
            ],
            out_specs=pl.BlockSpec((M, N), lambda: (0, 0)),
            cost_estimate=cost,
        )(xb, wb)

    # ---- Path B: the entire weight matrix fits in VMEM -> 1-D grid over M,
    #      W DMA'd exactly once (constant index_map), full-K contraction. -----
    if K <= 4096 and ib * K * N <= (6 << 20):
        tm_pref = tm
        if M >= 256:
            # Keep >= 2 row blocks so v7x can shard the grid over its 2 TCs.
            tm_pref = min(tm_pref, _round_up((M + 1) // 2, 16))
        tm_b = _pick_tile(M, tm_pref, 16)
        Mp = _round_up(M, tm_b)
        xp = xb if Mp == M else jnp.pad(xb, ((0, Mp - M), (0, 0)))

        cost = pl.CostEstimate(
            flops=flops, transcendentals=M * N,
            bytes_accessed=ib * (Mp * K + K * N) + ob * Mp * N)

        out = pl.pallas_call(
            _matmul_sigmoid_kernel,
            out_shape=jax.ShapeDtypeStruct((Mp, N), out_dtype),
            grid_spec=pltpu.PrefetchScalarGridSpec(
                num_scalar_prefetch=0,
                grid=(Mp // tm_b,),
                in_specs=[
                    pl.BlockSpec((tm_b, K), lambda i: (i, 0)),
                    pl.BlockSpec((K, N), lambda i: (0, 0)),  # resident: 1 DMA total
                ],
                out_specs=pl.BlockSpec((tm_b, N), lambda i: (i, 0)),
            ),
            compiler_params=pltpu.CompilerParams(
                dimension_semantics=("parallel",),
                vmem_limit_bytes=_VMEM_LIMIT),
            cost_estimate=cost,
        )(xp, wb)
        return out[:M] if Mp != M else out

    # ---- Path C: large problem -> 3-D grid, reduction axis last, 512x512
    #      output tiles, deep bf16 tk, accumulate directly into the f32
    #      output block (no scratch, no epilogue copy pass). ------------------
    tm_c = _pick_tile(M, tm, 16)
    tn_c = _pick_tile(N, tn, 128)
    tk_c = _pick_tile(K, tk, 128)
    Mp, Np, Kp = _round_up(M, tm_c), _round_up(N, tn_c), _round_up(K, tk_c)

    xp = xb if (Mp == M and Kp == K) else jnp.pad(xb, ((0, Mp - M), (0, Kp - K)))
    wp = wb if (Kp == K and Np == N) else jnp.pad(wb, ((0, Kp - K), (0, Np - N)))

    cost = pl.CostEstimate(
        flops=flops, transcendentals=M * N,
        bytes_accessed=(ib * (Mp * Kp * (Np // tn_c) + Kp * Np * (Mp // tm_c))
                        + ob * Mp * Np))

    out = pl.pallas_call(
        _ktiled_kernel,
        out_shape=jax.ShapeDtypeStruct((Mp, Np), out_dtype),
        grid_spec=pltpu.PrefetchScalarGridSpec(
            num_scalar_prefetch=0,
            grid=(Mp // tm_c, Np // tn_c, Kp // tk_c),
            in_specs=[
                pl.BlockSpec((tm_c, tk_c), lambda i, j, k: (i, k)),
                pl.BlockSpec((tk_c, tn_c), lambda i, j, k: (k, j)),
            ],
            out_specs=pl.BlockSpec((tm_c, tn_c), lambda i, j, k: (i, j)),
        ),
        compiler_params=pltpu.CompilerParams(
            dimension_semantics=("parallel", "parallel", "arbitrary"),
            vmem_limit_bytes=_VMEM_LIMIT),
        cost_estimate=cost,
    )(xp, wp)
    return out[:M, :N] if (Mp != M or Np != N) else out


if __name__ == "__main__":
    # Shapes consistent with the module: in_size=256, out_size=128, batch=128.
    M, in_size, out_size = 128, 256, 128

    key = jax.random.PRNGKey(0)
    kx, kw = jax.random.split(key)

    target_embedding = jax.random.normal(kx, (M, in_size), dtype=jnp.float32)
    attention_weight = jax.random.normal(kw, (in_size, out_size), dtype=jnp.float32)

    out = linear_layer_forward(target_embedding, attention_weight)
    out = jax.block_until_ready(out)
    assert out.shape == (M, out_size)

    # Reference matching the kernel's numerics (bf16 operands, f32 accumulation).
    ref_bf16 = jax.nn.sigmoid(
        jnp.dot(target_embedding.astype(jnp.bfloat16),
                attention_weight.astype(jnp.bfloat16),
                preferred_element_type=jnp.float32))
    assert jnp.allclose(out, ref_bf16, atol=1e-4, rtol=1e-4)

    # Coarse check against the full-precision PyTorch semantics.
    ref_f32 = jax.nn.sigmoid(target_embedding @ attention_weight)
    assert jnp.allclose(out, ref_f32, atol=6e-2)

    print("KERNEL_OK")
</pallas_src>

<mosaic_0001>
module attributes {stable_mosaic.version = 11 : i64} {
  func.func @_matmul_sigmoid_kernel(%arg0: memref<128x256xbf16, #tpu.memory_space<vmem>>, %arg1: memref<256x128xbf16, #tpu.memory_space<vmem>>, %arg2: memref<128x128xf32, #tpu.memory_space<vmem>>) attributes {dimension_semantics = [], scalar_prefetch = 0 : i64, scratch_operands = 0 : i64, tpu.core_type = #tpu.core_type<tc>} {
    %c0 = arith.constant 0 : index
    %c0_0 = arith.constant 0 : index
    %0 = vector.load %arg0[%c0, %c0_0] : memref<128x256xbf16, #tpu.memory_space<vmem>>, vector<128x256xbf16>
    %c0_1 = arith.constant 0 : index
    %c0_2 = arith.constant 0 : index
    %1 = vector.load %arg1[%c0_1, %c0_2] : memref<256x128xbf16, #tpu.memory_space<vmem>>, vector<256x128xbf16>
    %cst = arith.constant dense<0.000000e+00> : vector<128x128xf32>
    %2 = tpu.matmul %0, %1, %cst {dimension_numbers = #tpu.dot_dimension_numbers<[1], [0], [0], [1], [0, 0, 1, 1], [], []>} : vector<128x256xbf16>, vector<256x128xbf16>, vector<128x128xf32> -> vector<128x128xf32>
    %3 = arith.negf %2 : vector<128x128xf32>
    %4 = math.exp %3 : vector<128x128xf32>
    %cst_3 = arith.constant 1.000000e+00 : f32
    %5 = vector.broadcast %cst_3 : f32 to vector<128x128xf32>
    %6 = arith.addf %5, %4 : vector<128x128xf32>
    %7 = arith.divf %5, %6 : vector<128x128xf32>
    %c0_4 = arith.constant 0 : index
    %c0_5 = arith.constant 0 : index
    %8 = vector.load %arg2[%c0_4, %c0_5] : memref<128x128xf32, #tpu.memory_space<vmem>>, vector<128x128xf32>
    tpu.vector_store %arg2[%c0_4, %c0_5], %7 {strides = array<i32>} : memref<128x128xf32, #tpu.memory_space<vmem>>, vector<128x128xf32>,
    return
  }
}

</mosaic_0001>

<llo_original>
// kernel: linear_layer_forward.1
$region0: #{linear_layer_forward.1}
  #allocation0 [shape = 'u32[]', space=smem, size = 0x4, offset = 0x4, fixed_abs, tag = 'smem constant byte address 0x4 - core index']
  #allocation1 [shape = 'u32[72,128]{1,0:T(1,128)}', space=vmem, size = 0x9000, scoped, tag = 'internal scratch']
  %s0 = inlined_call_operand.vmem [shape: bf16[128,256], index: 0, kind: input, shape index: {}]
  %s1 = inlined_call_operand.vmem [shape: bf16[256,128], index: 1, kind: input, shape index: {}]
  %s2 = inlined_call_operand.hbm [shape: f32[128,128], index: 2, kind: output, shape index: {}]
  %s3 = sld [smem:[#allocation0]]
  $region18: #{linear_layer_forward.1} parent=0
    _
  %s5 = ssub.s32 1, %s3
  %s6 = scalar_select 0, %s5, %s3
  $region1: #{linear_layer_forward.1} parent=0
    #allocation2 [shape = 'u8[65536]{0}', space=vmem, size = 0x10000, scoped, tag = 'output window, operand 0, single buffered']
    #allocation3 [shape = 's32[1]{0}', space=sflag, size = 0x4, scoped, tag = 'scoped memory for linear_layer_forward.1']
    %7 = vsyncpa [#allocation3], 0
    // Predicated region
    $region2: #{linear_layer_forward.1} parent=1 // pred_check
      _
    $region3: #{linear_layer_forward.1} parent=1 // pred_check_branch
      %9 = sbr.rel (0) target = $region5
    $region4: #{linear_layer_forward.1} parent=1 // pred_region
      _
    $region5: #{linear_layer_forward.1} parent=1 // pred_fallthru
      _
    // Predicated region
    $region6: #{linear_layer_forward.1} parent=1 // pred_check
      _
    $region7: #{linear_layer_forward.1} parent=1 // pred_check_branch
      %11 = sbr.rel (0) target = $region9
    $region8: #{linear_layer_forward.1} parent=1 // pred_region
      _
    $region9: #{linear_layer_forward.1} parent=1 // pred_fallthru
      _
    %v12 = vld [vmem:[%s0] sm:$0xff]
    %v13 = vld [vmem:[%s0 + $0x8] sm:$0xff]
    %v14 = vld [vmem:[%s0 + $0x10] sm:$0xff]
    %v15 = vld [vmem:[%s0 + $0x18] sm:$0xff]
    %v16 = vld [vmem:[%s0 + $0x20] sm:$0xff]
    %v17 = vld [vmem:[%s0 + $0x28] sm:$0xff]
    %v18 = vld [vmem:[%s0 + $0x30] sm:$0xff]
    %v19 = vld [vmem:[%s0 + $0x38] sm:$0xff]
    %v20 = vld [vmem:[%s0 + $0x40] sm:$0xff]
    %v21 = vld [vmem:[%s0 + $0x48] sm:$0xff]
    %v22 = vld [vmem:[%s0 + $0x50] sm:$0xff]
    %v23 = vld [vmem:[%s0 + $0x58] sm:$0xff]
    %v24 = vld [vmem:[%s0 + $0x60] sm:$0xff]
    %v25 = vld [vmem:[%s0 + $0x68] sm:$0xff]
    %v26 = vld [vmem:[%s0 + $0x70] sm:$0xff]
    %v27 = vld [vmem:[%s0 + $0x78] sm:$0xff]
    %v28 = vld [vmem:[%s1] sm:$0xf]
    %v29 = vld [vmem:[%s1 + $0x4] sm:$0xf]
    %v30 = vld [vmem:[%s1 + $0x8] sm:$0xf]
    %v31 = vld [vmem:[%s1 + $0xc] sm:$0xf]
    %v32 = vld [vmem:[%s1 + $0x10] sm:$0xf]
    %v33 = vld [vmem:[%s1 + $0x14] sm:$0xf]
    %v34 = vld [vmem:[%s1 + $0x18] sm:$0xf]
    %v35 = vld [vmem:[%s1 + $0x1c] sm:$0xf]
    %v36 = vld [vmem:[%s1 + $0x20] sm:$0xf]
    %v37 = vld [vmem:[%s1 + $0x24] sm:$0xf]
    %v38 = vld [vmem:[%s1 + $0x28] sm:$0xf]
    %v39 = vld [vmem:[%s1 + $0x2c] sm:$0xf]
    %v40 = vld [vmem:[%s1 + $0x30] sm:$0xf]
    %v41 = vld [vmem:[%s1 + $0x34] sm:$0xf]
    %v42 = vld [vmem:[%s1 + $0x38] sm:$0xf]
    %v43 = vld [vmem:[%s1 + $0x3c] sm:$0xf]
    %v44 = vld [vmem:[%s1 + $0x40] sm:$0xf]
    %v45 = vld [vmem:[%s1 + $0x44] sm:$0xf]
    %v46 = vld [vmem:[%s1 + $0x48] sm:$0xf]
    %v47 = vld [vmem:[%s1 + $0x4c] sm:$0xf]
    %v48 = vld [vmem:[%s1 + $0x50] sm:$0xf]
    %v49 = vld [vmem:[%s1 + $0x54] sm:$0xf]
    %v50 = vld [vmem:[%s1 + $0x58] sm:$0xf]
    %v51 = vld [vmem:[%s1 + $0x5c] sm:$0xf]
    %v52 = vld [vmem:[%s1 + $0x60] sm:$0xf]
    %v53 = vld [vmem:[%s1 + $0x64] sm:$0xf]
    %v54 = vld [vmem:[%s1 + $0x68] sm:$0xf]
    %v55 = vld [vmem:[%s1 + $0x6c] sm:$0xf]
    %v56 = vld [vmem:[%s1 + $0x70] sm:$0xf]
    %v57 = vld [vmem:[%s1 + $0x74] sm:$0xf]
    %v58 = vld [vmem:[%s1 + $0x78] sm:$0xf]
    %v59 = vld [vmem:[%s1 + $0x7c] sm:$0xf]
    %v76 = vunpack.c.l.b16 %v12
    %v77 = vunpack.c.h.b16 %v12
    %v78 = vunpack.c.l.b16 %v13
    %v79 = vunpack.c.h.b16 %v13
    %v80 = vunpack.c.l.b16 %v14
    %v81 = vunpack.c.h.b16 %v14
    %v82 = vunpack.c.l.b16 %v15
    %v83 = vunpack.c.h.b16 %v15
    %v84 = vunpack.c.l.b16 %v16
    %v85 = vunpack.c.h.b16 %v16
    %v86 = vunpack.c.l.b16 %v17
    %v87 = vunpack.c.h.b16 %v17
    %v88 = vunpack.c.l.b16 %v18
    %v89 = vunpack.c.h.b16 %v18
    %v90 = vunpack.c.l.b16 %v19
    %v91 = vunpack.c.h.b16 %v19
    %v92 = vunpack.c.l.b16 %v20
    %v93 = vunpack.c.h.b16 %v20
    %v94 = vunpack.c.l.b16 %v21
    %v95 = vunpack.c.h.b16 %v21
    %v96 = vunpack.c.l.b16 %v22
    %v97 = vunpack.c.h.b16 %v22
    %v98 = vunpack.c.l.b16 %v23
    %v99 = vunpack.c.h.b16 %v23
    %v100 = vunpack.c.l.b16 %v24
    %v101 = vunpack.c.h.b16 %v24
    %v102 = vunpack.c.l.b16 %v25
    %v103 = vunpack.c.h.b16 %v25
    %v104 = vunpack.c.l.b16 %v26
    %v105 = vunpack.c.h.b16 %v26
    %v106 = vunpack.c.l.b16 %v27
    %v107 = vunpack.c.h.b16 %v27
    %v108 = vpack.c.b16 %v78, %v76
    %v109 = vpack.c.b16 %v79, %v77
    %v110 = vpack.c.b16 %v82, %v80
    %v111 = vpack.c.b16 %v83, %v81
    %v112 = vpack.c.b16 %v86, %v84
    %v113 = vpack.c.b16 %v87, %v85
    %v114 = vpack.c.b16 %v90, %v88
    %v115 = vpack.c.b16 %v91, %v89
    %v116 = vpack.c.b16 %v94, %v92
    %v117 = vpack.c.b16 %v95, %v93
    %v118 = vpack.c.b16 %v98, %v96
    %v119 = vpack.c.b16 %v99, %v97
    %v120 = vpack.c.b16 %v102, %v100
    %v121 = vpack.c.b16 %v103, %v101
    %v122 = vpack.c.b16 %v106, %v104
    %v123 = vpack.c.b16 %v107, %v105
    %v172 = vunpack.c.l.b16 %v28
    %v173 = vunpack.c.l.b16 %v29
    %v174 = vunpack.c.l.b16 %v30
    %v175 = vunpack.c.l.b16 %v31
    %v176 = vunpack.c.l.b16 %v32
    %v177 = vunpack.c.l.b16 %v33
    %v178 = vunpack.c.l.b16 %v34
    %v179 = vunpack.c.l.b16 %v35
    %v180 = vunpack.c.l.b16 %v36
    %v181 = vunpack.c.l.b16 %v37
    %v182 = vunpack.c.l.b16 %v38
    %v183 = vunpack.c.l.b16 %v39
    %v184 = vunpack.c.l.b16 %v40
    %v185 = vunpack.c.l.b16 %v41
    %v186 = vunpack.c.l.b16 %v42
    %v187 = vunpack.c.l.b16 %v43
    %v188 = vunpack.c.l.b16 %v44
    %v189 = vunpack.c.l.b16 %v45
    %v190 = vunpack.c.l.b16 %v46
    %v191 = vunpack.c.l.b16 %v47
    %v192 = vunpack.c.l.b16 %v48
    %v193 = vunpack.c.l.b16 %v49
    %v194 = vunpack.c.l.b16 %v50
    %v195 = vunpack.c.l.b16 %v51
    %v196 = vunpack.c.l.b16 %v52
    %v197 = vunpack.c.l.b16 %v53
    %v198 = vunpack.c.l.b16 %v54
    %v199 = vunpack.c.l.b16 %v55
    %v200 = vunpack.c.l.b16 %v56
    %v201 = vunpack.c.l.b16 %v57
    %v202 = vunpack.c.l.b16 %v58
    %v203 = vunpack.c.l.b16 %v59
    %v204 = vpack.c.b16 %v173, %v172
    %v205 = vpack.c.b16 %v175, %v174
    %v206 = vpack.c.b16 %v177, %v176
    %v207 = vpack.c.b16 %v179, %v178
    %v208 = vpack.c.b16 %v181, %v180
    %v209 = vpack.c.b16 %v183, %v182
    %v210 = vpack.c.b16 %v185, %v184
    %v211 = vpack.c.b16 %v187, %v186
    %v212 = vpack.c.b16 %v189, %v188
    %v213 = vpack.c.b16 %v191, %v190
    %v214 = vpack.c.b16 %v193, %v192
    %v215 = vpack.c.b16 %v195, %v194
    %v216 = vpack.c.b16 %v197, %v196
    %v217 = vpack.c.b16 %v199, %v198
    %v218 = vpack.c.b16 %v201, %v200
    %v219 = vpack.c.b16 %v203, %v202
    %236 = vmatpush.bf16.msra.mxu0 %v211
    %237 = vmatpush.bf16.msra.mxu0 %v210
    %238 = vmatpush.bf16.msra.mxu0 %v209
    %239 = vmatpush.bf16.msra.mxu0 %v208
    %240 = vmatpush.bf16.msra.mxu0 %v207
    %241 = vmatpush.bf16.msra.mxu0 %v206
    %242 = vmatpush.bf16.msra.mxu0 %v205
    %243 = vmatpush.bf16.msra.mxu0 %v204
    %244 = vmatmul.bf16.gmra.mxu0 %v108
    %v245 = vpop.f32.mrf.mxu0
    %v246 = vadd.f32 0.0, %v245
    %v247 = vpop.f32.mrf.mxu0
    %v248 = vadd.f32 0.0, %v247
    %249 = vmatmul.bf16.gmra.mxu0 %v110
    %v250 = vpop.f32.mrf.mxu0
    %v251 = vadd.f32 0.0, %v250
    %v252 = vpop.f32.mrf.mxu0
    %v253 = vadd.f32 0.0, %v252
    %254 = vmatmul.bf16.gmra.mxu0 %v112
    %v255 = vpop.f32.mrf.mxu0
    %v256 = vadd.f32 0.0, %v255
    %v257 = vpop.f32.mrf.mxu0
    %v258 = vadd.f32 0.0, %v257
    %259 = vmatmul.bf16.gmra.mxu0 %v114
    %v260 = vpop.f32.mrf.mxu0
    %v261 = vadd.f32 0.0, %v260
    %v262 = vpop.f32.mrf.mxu0
    %v263 = vadd.f32 0.0, %v262
    %264 = vmatmul.bf16.gmra.mxu0 %v116
    %v265 = vpop.f32.mrf.mxu0
    %v266 = vadd.f32 0.0, %v265
    %v267 = vpop.f32.mrf.mxu0
    %v268 = vadd.f32 0.0, %v267
    %269 = vmatmul.bf16.gmra.mxu0 %v118
    %v270 = vpop.f32.mrf.mxu0
    %v271 = vadd.f32 0.0, %v270
    %v272 = vpop.f32.mrf.mxu0
    %v273 = vadd.f32 0.0, %v272
    %274 = vmatmul.bf16.gmra.mxu0 %v120
    %v275 = vpop.f32.mrf.mxu0
    %v276 = vadd.f32 0.0, %v275
    %v277 = vpop.f32.mrf.mxu0
    %v278 = vadd.f32 0.0, %v277
    %279 = vmatmul.bf16.gmra.mxu0 %v122
    %v280 = vpop.f32.mrf.mxu0
    %v281 = vadd.f32 0.0, %v280
    %v282 = vpop.f32.mrf.mxu0
    %v283 = vadd.f32 0.0, %v282
    %284 = vdwg.mxu0
    %285 = vmatpush.bf16.msra.mxu0 %v219
    %286 = vmatpush.bf16.msra.mxu0 %v218
    %287 = vmatpush.bf16.msra.mxu0 %v217
    %288 = vmatpush.bf16.msra.mxu0 %v216
    %289 = vmatpush.bf16.msra.mxu0 %v215
    %290 = vmatpush.bf16.msra.mxu0 %v214
    %291 = vmatpush.bf16.msra.mxu0 %v213
    %292 = vmatpush.bf16.msra.mxu0 %v212
    %293 = vmatmul.bf16.gmra.mxu0 %v109
    %v294 = vpop.f32.mrf.mxu0
    %v295 = vadd.f32 %v246, %v294
    %v296 = vpop.f32.mrf.mxu0
    %v297 = vadd.f32 %v248, %v296
    %298 = vmatmul.bf16.gmra.mxu0 %v111
    %v299 = vpop.f32.mrf.mxu0
    %v300 = vadd.f32 %v251, %v299
    %v301 = vpop.f32.mrf.mxu0
    %v302 = vadd.f32 %v253, %v301
    %303 = vmatmul.bf16.gmra.mxu0 %v113
    %v304 = vpop.f32.mrf.mxu0
    %v305 = vadd.f32 %v256, %v304
    %v306 = vpop.f32.mrf.mxu0
    %v307 = vadd.f32 %v258, %v306
    %308 = vmatmul.bf16.gmra.mxu0 %v115
    %v309 = vpop.f32.mrf.mxu0
    %v310 = vadd.f32 %v261, %v309
    %v311 = vpop.f32.mrf.mxu0
    %v312 = vadd.f32 %v263, %v311
    %313 = vmatmul.bf16.gmra.mxu0 %v117
    %v314 = vpop.f32.mrf.mxu0
    %v315 = vadd.f32 %v266, %v314
    %v316 = vpop.f32.mrf.mxu0
    %v317 = vadd.f32 %v268, %v316
    %318 = vmatmul.bf16.gmra.mxu0 %v119
    %v319 = vpop.f32.mrf.mxu0
    %v320 = vadd.f32 %v271, %v319
    %v321 = vpop.f32.mrf.mxu0
    %v322 = vadd.f32 %v273, %v321
    %323 = vmatmul.bf16.gmra.mxu0 %v121
    %v324 = vpop.f32.mrf.mxu0
    %v325 = vadd.f32 %v276, %v324
    %v326 = vpop.f32.mrf.mxu0
    %v327 = vadd.f32 %v278, %v326
    %328 = vmatmul.bf16.gmra.mxu0 %v123
    %v329 = vpop.f32.mrf.mxu0
    %v330 = vadd.f32 %v281, %v329
    %v331 = vpop.f32.mrf.mxu0
    %v332 = vadd.f32 %v283, %v331
    %333 = vdwg.mxu0
    %v334 = vxor.u32 %v295, 2147483648
    %v335 = vxor.u32 %v297, 2147483648
    %v336 = vxor.u32 %v300, 2147483648
    %v337 = vxor.u32 %v302, 2147483648
    %v338 = vxor.u32 %v305, 2147483648
    %v339 = vxor.u32 %v307, 2147483648
    %v340 = vxor.u32 %v310, 2147483648
    %v341 = vxor.u32 %v312, 2147483648
    %v342 = vxor.u32 %v315, 2147483648
    %v343 = vxor.u32 %v317, 2147483648
    %v344 = vxor.u32 %v320, 2147483648
    %v345 = vxor.u32 %v322, 2147483648
    %v346 = vxor.u32 %v325, 2147483648
    %v347 = vxor.u32 %v327, 2147483648
    %v348 = vxor.u32 %v330, 2147483648
    %v349 = vxor.u32 %v332, 2147483648
    %v350 = vmul.f32 %v334, 1.442695
    %v351 = vpow.pop %v350
    %v352 = vmul.f32 %v335, 1.442695
    %v353 = vpow.pop %v352
    %v354 = vmul.f32 %v336, 1.442695
    %v355 = vpow.pop %v354
    %v356 = vmul.f32 %v337, 1.442695
    %v357 = vpow.pop %v356
    %v358 = vmul.f32 %v338, 1.442695
    %v359 = vpow.pop %v358
    %v360 = vmul.f32 %v339, 1.442695
    %v361 = vpow.pop %v360
    %v362 = vmul.f32 %v340, 1.442695
    %v363 = vpow.pop %v362
    %v364 = vmul.f32 %v341, 1.442695
    %v365 = vpow.pop %v364
    %v366 = vmul.f32 %v342, 1.442695
    %v367 = vpow.pop %v366
    %v368 = vmul.f32 %v343, 1.442695
    %v369 = vpow.pop %v368
    %v370 = vmul.f32 %v344, 1.442695
    %v371 = vpow.pop %v370
    %v372 = vmul.f32 %v345, 1.442695
    %v373 = vpow.pop %v372
    %v374 = vmul.f32 %v346, 1.442695
    %v375 = vpow.pop %v374
    %v376 = vmul.f32 %v347, 1.442695
    %v377 = vpow.pop %v376
    %v378 = vmul.f32 %v348, 1.442695
    %v379 = vpow.pop %v378
    %v380 = vmul.f32 %v349, 1.442695
    %v381 = vpow.pop %v380
    %v382 = vadd.f32 %v351, 1.0
    %v383 = vadd.f32 %v353, 1.0
    %v384 = vadd.f32 %v355, 1.0
    %v385 = vadd.f32 %v357, 1.0
    %v386 = vadd.f32 %v359, 1.0
    %v387 = vadd.f32 %v361, 1.0
    %v388 = vadd.f32 %v363, 1.0
    %v389 = vadd.f32 %v365, 1.0
    %v390 = vadd.f32 %v367, 1.0
    %v391 = vadd.f32 %v369, 1.0
    %v392 = vadd.f32 %v371, 1.0
    %v393 = vadd.f32 %v373, 1.0
    %v394 = vadd.f32 %v375, 1.0
    %v395 = vadd.f32 %v377, 1.0
    %v396 = vadd.f32 %v379, 1.0
    %v397 = vadd.f32 %v381, 1.0
    %v398 = vrcp.pop %v382
    %v399 = vmul.f32 %v382, %v398
    %v400 = vsub.f32 1.0, %v399
    %v401 = vmul.f32 %v398, %v400
    %v402 = vadd.f32 %v398, %v401
    %vm403 = vweird.f32 %v382
    %vm404 = vweird.f32 %v398
    %vm405 = vmor %vm403, %vm404
    %v406 = vsel %vm405, %v398, %v402
    %v407 = vand.u32 2147483647, %v382
    %vm408 = vcmp.eq.f32.partialorder %v407, 8.507059e+37
    %v409 = vand.u32 %v382, 2147483648
    %v410 = vor.u32 1.1754944e-38, %v409
    %v411 = vsel %vm408, %v410, %v406
    %v412 = vmul.f32 1.0, %v411
    %v413 = vrcp.pop %v383
    %v414 = vmul.f32 %v383, %v413
    %v415 = vsub.f32 1.0, %v414
    %v416 = vmul.f32 %v413, %v415
    %v417 = vadd.f32 %v413, %v416
    %vm418 = vweird.f32 %v383
    %vm419 = vweird.f32 %v413
    %vm420 = vmor %vm418, %vm419
    %v421 = vsel %vm420, %v413, %v417
    %v422 = vand.u32 2147483647, %v383
    %vm423 = vcmp.eq.f32.partialorder %v422, 8.507059e+37
    %v424 = vand.u32 %v383, 2147483648
    %v425 = vor.u32 1.1754944e-38, %v424
    %v426 = vsel %vm423, %v425, %v421
    %v427 = vmul.f32 1.0, %v426
    %v428 = vrcp.pop %v384
    %v429 = vmul.f32 %v384, %v428
    %v430 = vsub.f32 1.0, %v429
    %v431 = vmul.f32 %v428, %v430
    %v432 = vadd.f32 %v428, %v431
    %vm433 = vweird.f32 %v384
    %vm434 = vweird.f32 %v428
    %vm435 = vmor %vm433, %vm434
    %v436 = vsel %vm435, %v428, %v432
    %v437 = vand.u32 2147483647, %v384
    %vm438 = vcmp.eq.f32.partialorder %v437, 8.507059e+37
    %v439 = vand.u32 %v384, 2147483648
    %v440 = vor.u32 1.1754944e-38, %v439
    %v441 = vsel %vm438, %v440, %v436
    %v442 = vmul.f32 1.0, %v441
    %v443 = vrcp.pop %v385
    %v444 = vmul.f32 %v385, %v443
    %v445 = vsub.f32 1.0, %v444
    %v446 = vmul.f32 %v443, %v445
    %v447 = vadd.f32 %v443, %v446
    %vm448 = vweird.f32 %v385
    %vm449 = vweird.f32 %v443
    %vm450 = vmor %vm448, %vm449
    %v451 = vsel %vm450, %v443, %v447
    %v452 = vand.u32 2147483647, %v385
    %vm453 = vcmp.eq.f32.partialorder %v452, 8.507059e+37
    %v454 = vand.u32 %v385, 2147483648
    %v455 = vor.u32 1.1754944e-38, %v454
    %v456 = vsel %vm453, %v455, %v451
    %v457 = vmul.f32 1.0, %v456
    %v458 = vrcp.pop %v386
    %v459 = vmul.f32 %v386, %v458
    %v460 = vsub.f32 1.0, %v459
    %v461 = vmul.f32 %v458, %v460
    %v462 = vadd.f32 %v458, %v461
    %vm463 = vweird.f32 %v386
    %vm464 = vweird.f32 %v458
    %vm465 = vmor %vm463, %vm464
    %v466 = vsel %vm465, %v458, %v462
    %v467 = vand.u32 2147483647, %v386
    %vm468 = vcmp.eq.f32.partialorder %v467, 8.507059e+37
    %v469 = vand.u32 %v386, 2147483648
    %v470 = vor.u32 1.1754944e-38, %v469
    %v471 = vsel %vm468, %v470, %v466
    %v472 = vmul.f32 1.0, %v471
    %v473 = vrcp.pop %v387
    %v474 = vmul.f32 %v387, %v473
    %v475 = vsub.f32 1.0, %v474
    %v476 = vmul.f32 %v473, %v475
    %v477 = vadd.f32 %v473, %v476
    %vm478 = vweird.f32 %v387
    %vm479 = vweird.f32 %v473
    %vm480 = vmor %vm478, %vm479
    %v481 = vsel %vm480, %v473, %v477
    %v482 = vand.u32 2147483647, %v387
    %vm483 = vcmp.eq.f32.partialorder %v482, 8.507059e+37
    %v484 = vand.u32 %v387, 2147483648
    %v485 = vor.u32 1.1754944e-38, %v484
    %v486 = vsel %vm483, %v485, %v481
    %v487 = vmul.f32 1.0, %v486
    %v488 = vrcp.pop %v388
    %v489 = vmul.f32 %v388, %v488
    %v490 = vsub.f32 1.0, %v489
    %v491 = vmul.f32 %v488, %v490
    %v492 = vadd.f32 %v488, %v491
    %vm493 = vweird.f32 %v388
    %vm494 = vweird.f32 %v488
    %vm495 = vmor %vm493, %vm494
    %v496 = vsel %vm495, %v488, %v492
    %v497 = vand.u32 2147483647, %v388
    %vm498 = vcmp.eq.f32.partialorder %v497, 8.507059e+37
    %v499 = vand.u32 %v388, 2147483648
    %v500 = vor.u32 1.1754944e-38, %v499
    %v501 = vsel %vm498, %v500, %v496
    %v502 = vmul.f32 1.0, %v501
    %v503 = vrcp.pop %v389
    %v504 = vmul.f32 %v389, %v503
    %v505 = vsub.f32 1.0, %v504
    %v506 = vmul.f32 %v503, %v505
    %v507 = vadd.f32 %v503, %v506
    %vm508 = vweird.f32 %v389
    %vm509 = vweird.f32 %v503
    %vm510 = vmor %vm508, %vm509
    %v511 = vsel %vm510, %v503, %v507
    %v512 = vand.u32 2147483647, %v389
    %vm513 = vcmp.eq.f32.partialorder %v512, 8.507059e+37
    %v514 = vand.u32 %v389, 2147483648
    %v515 = vor.u32 1.1754944e-38, %v514
    %v516 = vsel %vm513, %v515, %v511
    %v517 = vmul.f32 1.0, %v516
    %v518 = vrcp.pop %v390
    %v519 = vmul.f32 %v390, %v518
    %v520 = vsub.f32 1.0, %v519
    %v521 = vmul.f32 %v518, %v520
    %v522 = vadd.f32 %v518, %v521
    %vm523 = vweird.f32 %v390
    %vm524 = vweird.f32 %v518
    %vm525 = vmor %vm523, %vm524
    %v526 = vsel %vm525, %v518, %v522
    %v527 = vand.u32 2147483647, %v390
    %vm528 = vcmp.eq.f32.partialorder %v527, 8.507059e+37
    %v529 = vand.u32 %v390, 2147483648
    %v530 = vor.u32 1.1754944e-38, %v529
    %v531 = vsel %vm528, %v530, %v526
    %v532 = vmul.f32 1.0, %v531
    %v533 = vrcp.pop %v391
    %v534 = vmul.f32 %v391, %v533
    %v535 = vsub.f32 1.0, %v534
    %v536 = vmul.f32 %v533, %v535
    %v537 = vadd.f32 %v533, %v536
    %vm538 = vweird.f32 %v391
    %vm539 = vweird.f32 %v533
    %vm540 = vmor %vm538, %vm539
    %v541 = vsel %vm540, %v533, %v537
    %v542 = vand.u32 2147483647, %v391
    %vm543 = vcmp.eq.f32.partialorder %v542, 8.507059e+37
    %v544 = vand.u32 %v391, 2147483648
    %v545 = vor.u32 1.1754944e-38, %v544
    %v546 = vsel %vm543, %v545, %v541
    %v547 = vmul.f32 1.0, %v546
    %v548 = vrcp.pop %v392
    %v549 = vmul.f32 %v392, %v548
    %v550 = vsub.f32 1.0, %v549
    %v551 = vmul.f32 %v548, %v550
    %v552 = vadd.f32 %v548, %v551
    %vm553 = vweird.f32 %v392
    %vm554 = vweird.f32 %v548
    %vm555 = vmor %vm553, %vm554
    %v556 = vsel %vm555, %v548, %v552
    %v557 = vand.u32 2147483647, %v392
    %vm558 = vcmp.eq.f32.partialorder %v557, 8.507059e+37
    %v559 = vand.u32 %v392, 2147483648
    %v560 = vor.u32 1.1754944e-38, %v559
    %v561 = vsel %vm558, %v560, %v556
    %v562 = vmul.f32 1.0, %v561
    %v563 = vrcp.pop %v393
    %v564 = vmul.f32 %v393, %v563
    %v565 = vsub.f32 1.0, %v564
    %v566 = vmul.f32 %v563, %v565
    %v567 = vadd.f32 %v563, %v566
    %vm568 = vweird.f32 %v393
    %vm569 = vweird.f32 %v563
    %vm570 = vmor %vm568, %vm569
    %v571 = vsel %vm570, %v563, %v567
    %v572 = vand.u32 2147483647, %v393
    %vm573 = vcmp.eq.f32.partialorder %v572, 8.507059e+37
    %v574 = vand.u32 %v393, 2147483648
    %v575 = vor.u32 1.1754944e-38, %v574
    %v576 = vsel %vm573, %v575, %v571
    %v577 = vmul.f32 1.0, %v576
    %v578 = vrcp.pop %v394
    %v579 = vmul.f32 %v394, %v578
    %v580 = vsub.f32 1.0, %v579
    %v581 = vmul.f32 %v578, %v580
    %v582 = vadd.f32 %v578, %v581
    %vm583 = vweird.f32 %v394
    %vm584 = vweird.f32 %v578
    %vm585 = vmor %vm583, %vm584
    %v586 = vsel %vm585, %v578, %v582
    %v587 = vand.u32 2147483647, %v394
    %vm588 = vcmp.eq.f32.partialorder %v587, 8.507059e+37
    %v589 = vand.u32 %v394, 2147483648
    %v590 = vor.u32 1.1754944e-38, %v589
    %v591 = vsel %vm588, %v590, %v586
    %v592 = vmul.f32 1.0, %v591
    %v593 = vrcp.pop %v395
    %v594 = vmul.f32 %v395, %v593
    %v595 = vsub.f32 1.0, %v594
    %v596 = vmul.f32 %v593, %v595
    %v597 = vadd.f32 %v593, %v596
    %vm598 = vweird.f32 %v395
    %vm599 = vweird.f32 %v593
    %vm600 = vmor %vm598, %vm599
    %v601 = vsel %vm600, %v593, %v597
    %v602 = vand.u32 2147483647, %v395
    %vm603 = vcmp.eq.f32.partialorder %v602, 8.507059e+37
    %v604 = vand.u32 %v395, 2147483648
    %v605 = vor.u32 1.1754944e-38, %v604
    %v606 = vsel %vm603, %v605, %v601
    %v607 = vmul.f32 1.0, %v606
    %v608 = vrcp.pop %v396
    %v609 = vmul.f32 %v396, %v608
    %v610 = vsub.f32 1.0, %v609
    %v611 = vmul.f32 %v608, %v610
    %v612 = vadd.f32 %v608, %v611
    %vm613 = vweird.f32 %v396
    %vm614 = vweird.f32 %v608
    %vm615 = vmor %vm613, %vm614
    %v616 = vsel %vm615, %v608, %v612
    %v617 = vand.u32 2147483647, %v396
    %vm618 = vcmp.eq.f32.partialorder %v617, 8.507059e+37
    %v619 = vand.u32 %v396, 2147483648
    %v620 = vor.u32 1.1754944e-38, %v619
    %v621 = vsel %vm618, %v620, %v616
    %v622 = vmul.f32 1.0, %v621
    %v623 = vrcp.pop %v397
    %v624 = vmul.f32 %v397, %v623
    %v625 = vsub.f32 1.0, %v624
    %v626 = vmul.f32 %v623, %v625
    %v627 = vadd.f32 %v623, %v626
    %vm628 = vweird.f32 %v397
    %vm629 = vweird.f32 %v623
    %vm630 = vmor %vm628, %vm629
    %v631 = vsel %vm630, %v623, %v627
    %v632 = vand.u32 2147483647, %v397
    %vm633 = vcmp.eq.f32.partialorder %v632, 8.507059e+37
    %v634 = vand.u32 %v397, 2147483648
    %v635 = vor.u32 1.1754944e-38, %v634
    %v636 = vsel %vm633, %v635, %v631
    %v637 = vmul.f32 1.0, %v636
    %638 = vst [vmem:[#allocation2] sm:$0xff] %v412
    %639 = vst [vmem:[#allocation2 + $0x8] sm:$0xff] %v427
    %640 = vst [vmem:[#allocation2 + $0x10] sm:$0xff] %v442
    %641 = vst [vmem:[#allocation2 + $0x18] sm:$0xff] %v457
    %642 = vst [vmem:[#allocation2 + $0x20] sm:$0xff] %v472
    %643 = vst [vmem:[#allocation2 + $0x28] sm:$0xff] %v487
    %644 = vst [vmem:[#allocation2 + $0x30] sm:$0xff] %v502
    %645 = vst [vmem:[#allocation2 + $0x38] sm:$0xff] %v517
    %646 = vst [vmem:[#allocation2 + $0x40] sm:$0xff] %v532
    %647 = vst [vmem:[#allocation2 + $0x48] sm:$0xff] %v547
    %648 = vst [vmem:[#allocation2 + $0x50] sm:$0xff] %v562
    %649 = vst [vmem:[#allocation2 + $0x58] sm:$0xff] %v577
    %650 = vst [vmem:[#allocation2 + $0x60] sm:$0xff] %v592
    %651 = vst [vmem:[#allocation2 + $0x68] sm:$0xff] %v607
    %652 = vst [vmem:[#allocation2 + $0x70] sm:$0xff] %v622
    %653 = vst [vmem:[#allocation2 + $0x78] sm:$0xff] %v637
    // Predicated region
    $region10: #{linear_layer_forward.1} parent=1 // pred_check
      _
    $region11: #{linear_layer_forward.1} parent=1 // pred_check_branch
      %655 = sbr.rel (0) target = $region13
    $region12: #{linear_layer_forward.1} parent=1 // pred_region
      %657 = vsyncadd [#allocation3], 0
      %s658 = sshll.u32 [#allocation2], 4
      %s659 = int_to_ptr.vmem [resolvable:$true] %s658
      %s660 = sshll.u32 %s2, 4
      %s661 = int_to_ptr.hbm [resolvable:$true] %s660
      %666 = dma.vmem_to_hbm [thread:$0]  %s659, 2048, %s661, [#allocation3], 128, 128, 8
    $region13: #{linear_layer_forward.1} parent=1 // pred_fallthru
      _
    // Predicated region
    $region14: #{linear_layer_forward.1} parent=1 // pred_check
      _
    $region15: #{linear_layer_forward.1} parent=1 // pred_check_branch
      %668 = sbr.rel (0) target = $region17
    $region16: #{linear_layer_forward.1} parent=1 // pred_region
      %670 = dma.done [#allocation3], 2048
    $region17: #{linear_layer_forward.1} parent=1 // pred_fallthru
      _
    %671 = vsyncpa [#allocation3], 1

</llo_original>
